<compile_context>
chip_gen: v7x
topology: tpu7x:2x2x1
jax: 0.10.0
libtpu: 0.0.40
codegen_flags: <defaults>
</compile_context>

<pallas_src>
import functools

import jax
import jax.numpy as jnp
from jax import lax
from jax.experimental import pallas as pl
from jax.experimental.pallas import tpu as pltpu


def _edge_loss_kernel(H, W, L, NC, tb, nb_per_core, needs_mask,
                      o_ref, t_ref, acc_ref):
    """o_ref/t_ref: (tb, L) lane-dense tiles, one (n,c) slab per row (L=H*W).
    acc_ref: resident (tb, L) f32 elementwise accumulator (per core split)."""
    # Zero this core-split's accumulator on its first inner (reduction) step.
    @pl.when(pl.program_id(1) == 0)
    def _():
        acc_ref[...] = jnp.zeros_like(acc_ref)

    # roll is linear: compute d = out - tgt once; edge diffs are roll(d) - d.
    d = o_ref[...].astype(jnp.float32) - t_ref[...].astype(jnp.float32)

    if needs_mask:
        # Ragged tail / phantom blocks: zero rows whose logical slab index is
        # >= NC.  All rolls below are per-row lane rolls, so zeroed rows
        # contribute exactly 0 and never leak into valid rows.
        base = (pl.program_id(0) * nb_per_core + pl.program_id(1)) * tb
        row = base + lax.broadcasted_iota(jnp.int32, d.shape, 0)
        d = jnp.where(row < NC, d, 0.0)

    # Vertical edge (roll along H): in the (slab, h*W + w) fold this is an
    # EXACT lane roll by W -- the wrap within the slab row IS the H wrap.
    if H == 1:
        v_term = jnp.zeros_like(d)           # roll along a size-1 dim = identity
    else:
        v_term = pltpu.roll(d, shift=W, axis=1) - d

    # Horizontal edge (roll along W): lane roll by 1 is correct except at the
    # w == 0 lanes, whose source is the same image row's last column, i.e. a
    # lane roll by (L - W + 1).
    if W == 1:
        h_term = jnp.zeros_like(d)            # roll along a size-1 dim = identity
    else:
        r1 = pltpu.roll(d, shift=1, axis=1)
        rfix = pltpu.roll(d, shift=L - W + 1, axis=1)
        lane = lax.broadcasted_iota(jnp.int32, d.shape, 1)
        if (W & (W - 1)) == 0:                # power-of-two W: cheap bitwise test
            is_w0 = (lane & (W - 1)) == 0
        else:
            is_w0 = (lane % W) == 0
        h_term = jnp.where(is_w0, rfix, r1) - d

    acc_ref[...] += jnp.abs(h_term) + jnp.abs(v_term)


def _tpu_defaults():
    """Best-effort (vmem_capacity_bytes, tensorcore_count); safe fallbacks."""
    vmem_bytes, cores = 0, 1
    try:
        info = pltpu.get_tpu_info()
        v = getattr(info, "vmem_capacity_bytes", None)
        if isinstance(v, int) and v > 0:
            vmem_bytes = v
        for attr in ("num_cores", "core_count", "num_tensorcores",
                     "tensorcore_count"):
            c = getattr(info, attr, None)
            if isinstance(c, int) and c >= 1:
                cores = min(c, 2)             # no current TPU has >2 TCs/chip
                break
    except Exception:
        pass
    return vmem_bytes, cores


def edge_loss(output, target, *, target_tile_bytes=None, num_core_splits=None):
    """Pallas EdgeLoss. output/target: (N, C, H, W). Returns scalar f32."""
    assert output.shape == target.shape
    N, C, H, W = output.shape
    NC = N * C
    L = H * W
    if NC == 0 or L == 0 or L == 1:          # degenerate: both edges are zero
        return jnp.zeros((), jnp.float32)

    in_itemsize = jnp.dtype(output.dtype).itemsize
    vmem_bytes, detected_cores = _tpu_defaults()

    if num_core_splits is None:
        # v5e/v6e: 1 TC -> no phantom second accumulator shard.
        # v7x (2 TCs): leading "parallel" axis of size 2 shards across cores.
        num_core_splits = detected_cores
    if target_tile_bytes is None:
        # ~4 MiB tiles on 128 MiB-VMEM chips (v5e/v6e), ~2 MiB on 64 MiB (v7x)
        # or when the probe fails.  2 inputs x 2 buffers x tile + f32 acc.
        target_tile_bytes = (4 << 20) if vmem_bytes >= (96 << 20) else (2 << 20)

    # ---- choose how many (n,c) slab-rows to batch per grid step -------------
    tb_cap = max(1, target_tile_bytes // (L * in_itemsize))
    if tb_cap >= NC:
        tb = NC                               # single block (full-extent dim)
    else:
        tb = max(8, (tb_cap // 8) * 8)        # sublane rule: multiple of 8
        tb = min(tb, NC)

    num_blocks = -(-NC // tb)
    splits = max(1, min(num_core_splits, num_blocks))
    nb_per_core = -(-num_blocks // splits)
    covered = splits * nb_per_core * tb
    needs_mask = covered != NC                # ragged tail / phantom blocks

    # ---- lane-dense fold: one (n,c) slab per row of H*W lanes (no padding) --
    o2 = output.reshape(NC, L)
    t2 = target.reshape(NC, L)

    # Clamp phantom block indices (only possible when splits > 1); their rows
    # are zeroed by the in-kernel mask, so the duplicated read is harmless.
    def in_index_map(c, i):
        return (jnp.minimum(c * nb_per_core + i, num_blocks - 1), 0)

    in_spec = pl.BlockSpec((tb, L), in_index_map)
    out_spec = pl.BlockSpec(
        (None, tb, L),                        # leading dim squeezed -> 2-D ref
        lambda c, i: (c, 0, 0),               # resident accumulator per split
    )

    kernel = functools.partial(_edge_loss_kernel, H, W, L, NC, tb,
                               nb_per_core, needs_mask)

    acc_hbm_bytes = splits * tb * L * 4
    vmem_needed = 4 * tb * L * in_itemsize + 2 * tb * L * 4 + (1 << 20)
    vmem_limit = max(32 << 20, vmem_needed)

    acc = pl.pallas_call(
        kernel,
        out_shape=jax.ShapeDtypeStruct((splits, tb, L), jnp.float32),
        grid_spec=pltpu.PrefetchScalarGridSpec(
            num_scalar_prefetch=0,
            grid=(splits, nb_per_core),
            in_specs=[in_spec, in_spec],
            out_specs=out_spec,
        ),
        compiler_params=pltpu.CompilerParams(
            dimension_semantics=("parallel", "arbitrary"),
            vmem_limit_bytes=vmem_limit),
        cost_estimate=pl.CostEstimate(
            flops=8 * NC * L,
            transcendentals=0,
            bytes_accessed=2 * NC * L * in_itemsize + acc_hbm_bytes),
    )(o2, t2)

    # Single deferred reduction (no per-step XLU reduce / scalar carry).
    return jnp.sum(acc)


def edge_loss_ref(output, target):
    """Pure-JAX reference (mirrors the PyTorch forward)."""
    oh = jnp.roll(output, 1, axis=3) - output
    ov = jnp.roll(output, 1, axis=2) - output
    th = jnp.roll(target, 1, axis=3) - target
    tv = jnp.roll(target, 1, axis=2) - target
    return jnp.sum(jnp.abs(oh - th)) + jnp.sum(jnp.abs(ov - tv))


if __name__ == "__main__":
    key = jax.random.PRNGKey(0)
    k1, k2, k3, k4 = jax.random.split(key, 4)

    # Primary test: the module's natural small shape.
    N, C, H, W = 2, 4, 16, 16
    output = jax.random.normal(k1, (N, C, H, W), dtype=jnp.float32)
    target = jax.random.normal(k2, (N, C, H, W), dtype=jnp.float32)
    loss = jax.block_until_ready(edge_loss(output, target))
    ref = jax.block_until_ready(edge_loss_ref(output, target))
    assert jnp.allclose(loss, ref, rtol=1e-4, atol=1e-3), (loss, ref)

    # Secondary test: multi-step accumulation + ragged-tail mask path
    # (NC=12 slabs, tile of 8 rows -> 2 blocks, last one partially OOB).
    N2, C2, H2, W2 = 3, 4, 8, 128
    out2 = jax.random.normal(k3, (N2, C2, H2, W2), dtype=jnp.float32)
    tgt2 = jax.random.normal(k4, (N2, C2, H2, W2), dtype=jnp.float32)
    loss2 = jax.block_until_ready(edge_loss(out2, tgt2, target_tile_bytes=32 * 1024))
    ref2 = jax.block_until_ready(edge_loss_ref(out2, tgt2))
    assert jnp.allclose(loss2, ref2, rtol=1e-4, atol=1e-2), (loss2, ref2)

    print("KERNEL_OK")
</pallas_src>

<mosaic_0001>
module attributes {stable_mosaic.version = 11 : i64} {
  func.func @_edge_loss_kernel(%arg0: i32, %arg1: i32, %arg2: memref<8x256xf32, #tpu.memory_space<vmem>>, %arg3: memref<8x256xf32, #tpu.memory_space<vmem>>, %arg4: memref<1x8x256xf32, #tpu.memory_space<vmem>>) attributes {dimension_semantics = [#tpu.dimension_semantics<parallel>, #tpu.dimension_semantics<arbitrary>], iteration_bounds = array<i64: 1, 1>, scalar_prefetch = 0 : i64, scratch_operands = 0 : i64, tpu.core_type = #tpu.core_type<tc>, window_params = [{transform_indices = @transform_0, window_bounds = array<i64: 8, 256>}, {transform_indices = @transform_1, window_bounds = array<i64: 8, 256>}, {transform_indices = @transform_2, window_bounds = array<i64: 1, 8, 256>}]} {
    %c0_i32 = arith.constant 0 : i32
    %0 = arith.cmpi eq, %arg1, %c0_i32 : i32
    %1 = arith.extui %0 : i1 to i32
    %c0_i32_0 = arith.constant 0 : i32
    %2 = arith.cmpi ne, %1, %c0_i32_0 : i32
    scf.if %2 {
      %cst = arith.constant 0.000000e+00 : f32
      %26 = vector.broadcast %cst : f32 to vector<8x256xf32>
      %c0_11 = arith.constant 0 : index
      %c0_12 = arith.constant 0 : index
      %c0_13 = arith.constant 0 : index
      %27 = vector.load %arg4[%c0_11, %c0_12, %c0_13] : memref<1x8x256xf32, #tpu.memory_space<vmem>>, vector<1x8x256xf32>
      %28 = vector.shape_cast %27 : vector<1x8x256xf32> to vector<8x256xf32>
      %29 = vector.shape_cast %26 : vector<8x256xf32> to vector<1x8x256xf32>
      tpu.vector_store %arg4[%c0_11, %c0_12, %c0_13], %29 {strides = array<i32>} : memref<1x8x256xf32, #tpu.memory_space<vmem>>, vector<1x8x256xf32>,
    } else {
    }
    %c0 = arith.constant 0 : index
    %c0_1 = arith.constant 0 : index
    %3 = vector.load %arg2[%c0, %c0_1] : memref<8x256xf32, #tpu.memory_space<vmem>>, vector<8x256xf32>
    %c0_2 = arith.constant 0 : index
    %c0_3 = arith.constant 0 : index
    %4 = vector.load %arg3[%c0_2, %c0_3] : memref<8x256xf32, #tpu.memory_space<vmem>>, vector<8x256xf32>
    %5 = arith.subf %3, %4 : vector<8x256xf32>
    %c16_i32 = arith.constant 16 : i32
    %6 = tpu.dynamic_rotate %5 by %c16_i32 dim 1 : vector<8x256xf32>, i32 -> vector<8x256xf32>
    %7 = arith.subf %6, %5 : vector<8x256xf32>
    %c1_i32 = arith.constant 1 : i32
    %8 = tpu.dynamic_rotate %5 by %c1_i32 dim 1 : vector<8x256xf32>, i32 -> vector<8x256xf32>
    %c241_i32 = arith.constant 241 : i32
    %9 = tpu.dynamic_rotate %5 by %c241_i32 dim 1 : vector<8x256xf32>, i32 -> vector<8x256xf32>
    %10 = tpu.iota {dimensions = array<i32: 1>} : vector<8x256xi32>
    %c15_i32 = arith.constant 15 : i32
    %11 = vector.broadcast %c15_i32 : i32 to vector<8x256xi32>
    %12 = arith.andi %10, %11 : vector<8x256xi32>
    %c0_i32_4 = arith.constant 0 : i32
    %13 = vector.broadcast %c0_i32_4 : i32 to vector<8x256xi32>
    %14 = arith.cmpi eq, %12, %13 : vector<8x256xi32>
    %15 = arith.select %14, %9, %8 : vector<8x256xi1>, vector<8x256xf32>
    %16 = arith.subf %15, %5 : vector<8x256xf32>
    %c0_5 = arith.constant 0 : index
    %c0_6 = arith.constant 0 : index
    %c0_7 = arith.constant 0 : index
    %17 = vector.load %arg4[%c0_5, %c0_6, %c0_7] : memref<1x8x256xf32, #tpu.memory_space<vmem>>, vector<1x8x256xf32>
    %18 = vector.shape_cast %17 : vector<1x8x256xf32> to vector<8x256xf32>
    %19 = math.absf %16 : vector<8x256xf32>
    %20 = math.absf %7 : vector<8x256xf32>
    %21 = arith.addf %19, %20 : vector<8x256xf32>
    %22 = arith.addf %18, %21 : vector<8x256xf32>
    %c0_8 = arith.constant 0 : index
    %c0_9 = arith.constant 0 : index
    %c0_10 = arith.constant 0 : index
    %23 = vector.load %arg4[%c0_8, %c0_9, %c0_10] : memref<1x8x256xf32, #tpu.memory_space<vmem>>, vector<1x8x256xf32>
    %24 = vector.shape_cast %23 : vector<1x8x256xf32> to vector<8x256xf32>
    %25 = vector.shape_cast %22 : vector<8x256xf32> to vector<1x8x256xf32>
    tpu.vector_store %arg4[%c0_8, %c0_9, %c0_10], %25 {strides = array<i32>} : memref<1x8x256xf32, #tpu.memory_space<vmem>>, vector<1x8x256xf32>,
    return
  }
  func.func @transform_0(%arg0: i32, %arg1: i32) -> (i32, i32) {
    %c1_i32 = arith.constant 1 : i32
    %0 = arith.muli %arg0, %c1_i32 : i32
    %1 = arith.addi %0, %arg1 : i32
    %c0_i32 = arith.constant 0 : i32
    %2 = arith.minsi %1, %c0_i32 : i32
    %c0_i32_0 = arith.constant 0 : i32
    %c0_i32_1 = arith.constant 0 : i32
    return %2, %c0_i32_0 : i32, i32
  }
  func.func @transform_1(%arg0: i32, %arg1: i32) -> (i32, i32) {
    %c1_i32 = arith.constant 1 : i32
    %0 = arith.muli %arg0, %c1_i32 : i32
    %1 = arith.addi %0, %arg1 : i32
    %c0_i32 = arith.constant 0 : i32
    %2 = arith.minsi %1, %c0_i32 : i32
    %c0_i32_0 = arith.constant 0 : i32
    %c0_i32_1 = arith.constant 0 : i32
    return %2, %c0_i32_0 : i32, i32
  }
  func.func @transform_2(%arg0: i32, %arg1: i32) -> (i32, i32, i32) {
    %c0_i32 = arith.constant 0 : i32
    %c0_i32_0 = arith.constant 0 : i32
    %c0_i32_1 = arith.constant 0 : i32
    return %arg0, %c0_i32, %c0_i32_0 : i32, i32, i32
  }
}

</mosaic_0001>

<llo_original>
// kernel: tpu_custom_call.1
$region0: #{tpu_custom_call.1}
  #allocation0 [shape = 'u32[]', space=smem, size = 0x4, offset = 0x4, fixed_abs, tag = 'smem constant byte address 0x4 - core index']
  #allocation1 [shape = 'u32[144,128]{1,0:T(1,128)}', space=vmem, size = 0x12000, scoped, tag = 'internal scratch']
  %s0 = inlined_call_operand.hbm [shape: f32[8,256], index: 0, kind: input, shape index: {}]
  %s1 = inlined_call_operand.hbm [shape: f32[8,256], index: 1, kind: input, shape index: {}]
  %s2 = inlined_call_operand.hbm [shape: f32[1,8,256], index: 2, kind: output, shape index: {}]
  %s3 = sld [smem:[#allocation0]]
  $region30: #{tpu_custom_call.1} parent=0
    _
  %s5 = ssub.s32 1, %s3
  %s6 = scalar_select 0, %s5, %s3
  $region1: #{tpu_custom_call.1} parent=0
    #allocation2 [shape = 'u8[8192]{0}', space=vmem, size = 0x2000, scoped, tag = 'input window, operand 0, single buffered']
    #allocation3 [shape = 's32[1]{0}', space=sflag, size = 0x4, scoped, tag = 'scoped memory for tpu_custom_call.1']
    #allocation4 [shape = 's32[1]{0}', space=sflag, size = 0x4, scoped, tag = 'scoped memory for tpu_custom_call.1']
    #allocation5 [shape = 'u8[8192]{0}', space=vmem, size = 0x2000, scoped, tag = 'input window, operand 1, single buffered']
    #allocation6 [shape = 's32[1]{0}', space=sflag, size = 0x4, scoped, tag = 'scoped memory for tpu_custom_call.1']
    #allocation7 [shape = 'u8[8192]{0}', space=vmem, size = 0x2000, scoped, tag = 'output window, operand 0, single buffered']
    %7 = vsyncpa [#allocation3], 0
    %8 = vsyncpa [#allocation6], 0
    %9 = vsyncpa [#allocation4], 0
    // Predicated region
    $region2: #{tpu_custom_call.1} parent=1 // pred_check
      _
    $region3: #{tpu_custom_call.1} parent=1 // pred_check_branch
      %11 = sbr.rel (0) target = $region5
    $region4: #{tpu_custom_call.1} parent=1 // pred_region
      %s12 = sadd.s32 0, 0
      %p13 = scmp.lt.s32.totalorder %s12, 0
      %s14 = scalar_select %p13, %s12, 0
      %s16 = ssub.s32 256, 256
      %17 = vsyncadd [#allocation3], %s16
      %s18 = smul.addr %s14, 2
      %s19 = smul.addr %s18, 128
      %s20 = scalar_lea.hbm %s0, %s19
      %s22 = sshll.u32 [#allocation2], 4
      %s23 = int_to_ptr.vmem [resolvable:$true] %s22
      %25 = dma.hbm_to_vmem [thread:$0]  %s20, 256, %s23, [#allocation3]
    $region5: #{tpu_custom_call.1} parent=1 // pred_fallthru
      _
    // Predicated region
    $region6: #{tpu_custom_call.1} parent=1 // pred_check
      _
    $region7: #{tpu_custom_call.1} parent=1 // pred_check_branch
      %27 = sbr.rel (0) target = $region9
    $region8: #{tpu_custom_call.1} parent=1 // pred_region
      %s28 = sadd.s32 0, 0
      %p29 = scmp.lt.s32.totalorder %s28, 0
      %s30 = scalar_select %p29, %s28, 0
      %s32 = ssub.s32 256, 256
      %33 = vsyncadd [#allocation6], %s32
      %s34 = smul.addr %s30, 2
      %s35 = smul.addr %s34, 128
      %s36 = scalar_lea.hbm %s1, %s35
      %s38 = sshll.u32 [#allocation5], 4
      %s39 = int_to_ptr.vmem [resolvable:$true] %s38
      %41 = dma.hbm_to_vmem [thread:$0]  %s36, 256, %s39, [#allocation6]
    $region9: #{tpu_custom_call.1} parent=1 // pred_fallthru
      _
    // Predicated region
    $region10: #{tpu_custom_call.1} parent=1 // pred_check
      _
    $region11: #{tpu_custom_call.1} parent=1 // pred_check_branch
      %43 = sbr.rel (0) target = $region13
    $region12: #{tpu_custom_call.1} parent=1 // pred_region
      %44 = dma.done [#allocation3], 256
    $region13: #{tpu_custom_call.1} parent=1 // pred_fallthru
      _
    // Predicated region
    $region14: #{tpu_custom_call.1} parent=1 // pred_check
      _
    $region15: #{tpu_custom_call.1} parent=1 // pred_check_branch
      %46 = sbr.rel (0) target = $region17
    $region16: #{tpu_custom_call.1} parent=1 // pred_region
      %47 = dma.done [#allocation6], 256
    $region17: #{tpu_custom_call.1} parent=1 // pred_fallthru
      _
    %s48 = sadd.s32 0, 0
    %p49 = scmp.lt.s32.totalorder %s48, 0
    %s50 = scalar_select %p49, %s48, 0
    %s51 = sadd.s32 0, 0
    %p52 = scmp.lt.s32.totalorder %s51, 0
    %s53 = scalar_select %p52, %s51, 0
    %p54 = scmp.eq.s32.totalorder 0, 0
    // Predicated region
    $region18: #{tpu_custom_call.1} parent=1 // pred_check
      %p55 = pneg %p54
    $region19: #{tpu_custom_call.1} parent=1 // pred_check_branch
      %57 = sbr.rel (%p55) target = $region21
    $region20: #{tpu_custom_call.1} parent=1 // pred_region
      %58 = vst [vmem:[#allocation7] sm:$0xff] 0.0
      %59 = vst [vmem:[#allocation7 + $0x8] sm:$0xff] 0.0
    $region21: #{tpu_custom_call.1} parent=1 // pred_fallthru
      _
    %v60 = vld [vmem:[#allocation2] sm:$0xff]
    %v61 = vld [vmem:[#allocation2 + $0x8] sm:$0xff]
    %v62 = vld [vmem:[#allocation5] sm:$0xff]
    %v63 = vld [vmem:[#allocation5 + $0x8] sm:$0xff]
    %v64 = vsub.f32 %v60, %v62
    %v65 = vsub.f32 %v61, %v63
    %66 = vrot.lane.b32.xlu0 %v64, 16
    %v67 = vpop.permute.xlu0 %66
    %68 = vrot.lane.b32.xlu0 %v65, 16
    %v69 = vpop.permute.xlu0 %68
    %v70 = vlaneseq
    %v71 = vand.u32 %v70, 127
    %vm72 = vcmp.lt.s32.totalorder %v71, 16
    %v73 = vsel %vm72, %v67, %v69
    %v74 = vsel %vm72, %v69, %v67
    %v75 = vsub.f32 %v74, %v64
    %v76 = vsub.f32 %v73, %v65
    %77 = vrot.lane.b32.xlu0 %v64, 1
    %v78 = vpop.permute.xlu0 %77
    %79 = vrot.lane.b32.xlu0 %v65, 1
    %v80 = vpop.permute.xlu0 %79
    %vm81 = vcmp.lt.s32.totalorder %v71, 1
    %v82 = vsel %vm81, %v78, %v80
    %v83 = vsel %vm81, %v80, %v78
    %84 = vrot.lane.b32.xlu0 %v64, 113
    %v85 = vpop.permute.xlu0 %84
    %86 = vrot.lane.b32.xlu0 %v65, 113
    %v87 = vpop.permute.xlu0 %86
    %vm88 = vcmp.lt.s32.totalorder %v71, 113
    %v89 = vsel %vm88, %v85, %v87
    %v90 = vsel %vm88, %v87, %v85
    %v91 = vadd.s32 %v71, 128
    %v92 = vand.u32 %v71, 15
    %v93 = vand.u32 %v91, 15
    %vm94 = vcmp.eq.s32.totalorder %v92, 0
    %vm95 = vcmp.eq.s32.totalorder %v93, 0
    %v96 = vsel %vm94, %v89, %v83
    %v97 = vsel %vm95, %v90, %v82
    %v98 = vsub.f32 %v96, %v64
    %v99 = vsub.f32 %v97, %v65
    %v100 = vld [vmem:[#allocation7] sm:$0xff]
    %v101 = vld [vmem:[#allocation7 + $0x8] sm:$0xff]
    %v102 = vand.u32 2147483647, %v98
    %v103 = vand.u32 2147483647, %v99
    %v104 = vand.u32 2147483647, %v75
    %v105 = vand.u32 2147483647, %v76
    %v106 = vadd.f32 %v102, %v104
    %v107 = vadd.f32 %v103, %v105
    %v108 = vadd.f32 %v100, %v106
    %v109 = vadd.f32 %v101, %v107
    %110 = vst [vmem:[#allocation7] sm:$0xff] %v108
    %111 = vst [vmem:[#allocation7 + $0x8] sm:$0xff] %v109
    // Predicated region
    $region22: #{tpu_custom_call.1} parent=1 // pred_check
      _
    $region23: #{tpu_custom_call.1} parent=1 // pred_check_branch
      %113 = sbr.rel (0) target = $region25
    $region24: #{tpu_custom_call.1} parent=1 // pred_region
      %s115 = ssub.s32 256, 256
      %116 = vsyncadd [#allocation4], %s115
      %s118 = sshll.u32 [#allocation7], 4
      %s119 = int_to_ptr.vmem [resolvable:$true] %s118
      %121 = dma.vmem_to_hbm [thread:$0]  %s119, 256, %s2, [#allocation4]
    $region25: #{tpu_custom_call.1} parent=1 // pred_fallthru
      _
    // Predicated region
    $region26: #{tpu_custom_call.1} parent=1 // pred_check
      _
    $region27: #{tpu_custom_call.1} parent=1 // pred_check_branch
      %123 = sbr.rel (0) target = $region29
    $region28: #{tpu_custom_call.1} parent=1 // pred_region
      %124 = dma.done [#allocation4], 256
    $region29: #{tpu_custom_call.1} parent=1 // pred_fallthru
      _
    %125 = vsyncpa [#allocation3], 1
    %126 = vsyncpa [#allocation6], 1
    %127 = vsyncpa [#allocation4], 1

</llo_original>
